<compile_context>
chip_gen: v7x
topology: tpu7x:2x2x1
jax: 0.10.0
libtpu: 0.0.40
codegen_flags: <defaults>
</compile_context>

<pallas_src>
import functools

import jax
import jax.numpy as jnp
import numpy as np
from jax.experimental import pallas as pl
from jax.experimental.pallas import tpu as pltpu


def _merge_add_kernel(x_ref, c_ref, o_ref, *, head_tiles, tail_mode, ft):
    """One (1, ft, cb) tile: out = x + (frame-expanded) condition."""
    if tail_mode is None:
        o_ref[...] = (x_ref[...] + c_ref[...]).astype(o_ref.dtype)
        return

    t = pl.program_id(1)

    @pl.when(t < head_tiles)
    def _():
        o_ref[...] = (x_ref[...] + c_ref[...]).astype(o_ref.dtype)

    @pl.when(t >= head_tiles)
    def _():
        if tail_mode == 'last_frame':
            # c_ref is the (clamped) last condition tile; its final row is the
            # last condition frame, broadcast-added across the whole x tile.
            last = c_ref[...][:, ft - 1, :]                      # (1, cb)
            o_ref[...] = (x_ref[...] + last[:, None, :]).astype(o_ref.dtype)
        else:  # 'zero' expansion: condition contributes nothing in the tail.
            o_ref[...] = x_ref[...].astype(o_ref.dtype)


def merger_forward(x, condition_signal, *, n_frames_sample=16,
                   merge_mode='addition', frame_expansion='last_frame',
                   block_bytes=2 * 1024 * 1024):
    """Pallas implementation of Merger.forward (merge_mode='addition').

    x:                (B * n_frames_sample, C, H, W)
    condition_signal: (B * n_frames_condition, C, H, W)
    returns:          (B * n_frames_sample, C, H, W)
    """
    assert merge_mode == 'addition', "only merge_mode='addition' implemented"
    # TODO(synk): merge_mode 'attention_*' (ConditionalModel) is a separate
    # attention submodule and is not implemented here.
    assert frame_expansion in ('last_frame', 'zero', 'none')

    BF, C, H, W = x.shape
    F = int(n_frames_sample)
    assert BF % F == 0
    B = BF // F
    assert condition_signal.shape[0] % B == 0
    Fc = condition_signal.shape[0] // B
    assert condition_signal.shape[1:] == (C, H, W)
    assert Fc <= F, "more condition frames than sample frames is unsupported"
    if frame_expansion == 'none':
        assert Fc == F, "frame_expansion='none' requires matching frame counts"

    CHW = C * H * W
    itemsize = jnp.dtype(x.dtype).itemsize

    x3 = x.reshape(B, F, CHW)                 # contiguous reshape, free
    c3 = condition_signal.reshape(B, Fc, CHW)

    need_tail = F > Fc

    def _pick_ft(n_frames, n_cond, split):
        # Frame-tile: multiple of 8 (sublane tiling); when the head/tail split
        # is active it must also evenly cover the Fc condition frames.
        if split:
            cands = [t for t in range(8, n_cond + 1, 8) if n_cond % t == 0]
            if not cands:
                return None
        elif n_frames < 8:
            return n_frames            # block == full frame dim is always legal
        else:
            cands = list(range(8, n_frames + 1, 8))
        fit = [t for t in cands if t * CHW * itemsize <= block_bytes]
        return fit[-1] if fit else cands[0]

    ft = _pick_ft(F, Fc, need_tail)
    tail_mode = frame_expansion if need_tail else None

    if need_tail and ft is None:
        # Fc can't be covered by sublane-aligned frame tiles: fall back to
        # materializing the expanded condition once (extra HBM traffic, but the
        # hot add stays lane-dense and large-tiled).
        if frame_expansion == 'last_frame':
            fill = jnp.repeat(c3[:, -1:], F - Fc, axis=1)
        else:  # 'zero'
            fill = jnp.zeros((B, F - Fc, CHW), dtype=c3.dtype)
        c3 = jnp.concatenate([c3, fill], axis=1)
        Fc = F
        need_tail = False
        tail_mode = None
        ft = _pick_ft(F, F, False)

    # Lane-chunk: whole CHW if the block fits the budget, else the largest
    # multiple-of-128 divisor of CHW that does (keeps stores unmasked).
    cb = CHW
    if ft * CHW * itemsize > block_bytes:
        for cand in range(128, CHW, 128):
            if CHW % cand == 0 and ft * cand * itemsize <= block_bytes:
                cb = cand

    if need_tail:
        head_tiles = Fc // ft
        tf_tiles = head_tiles + pl.cdiv(F - Fc, ft)
    else:
        head_tiles = tf_tiles = pl.cdiv(F, ft)
    tc_tiles = max(CHW // cb, 1)

    def x_map(b, t, c):
        return (b, t, c)

    if need_tail:
        last_head = head_tiles - 1

        def c_map(b, t, c):
            # Tail tiles reuse the last condition tile; its block index is
            # constant across the tail, so the pipeline keeps it VMEM-resident.
            return (b, jnp.minimum(t, last_head), c)
    else:
        c_map = x_map

    kernel = functools.partial(_merge_add_kernel, head_tiles=head_tiles,
                               tail_mode=tail_mode, ft=ft)

    out3 = pl.pallas_call(
        kernel,
        out_shape=jax.ShapeDtypeStruct((B, F, CHW), x.dtype),
        grid=(B, tf_tiles, tc_tiles),
        in_specs=[
            pl.BlockSpec((1, ft, cb), x_map),
            pl.BlockSpec((1, ft, cb), c_map),
        ],
        out_specs=pl.BlockSpec((1, ft, cb), x_map),
        compiler_params=pltpu.CompilerParams(
            dimension_semantics=("parallel", "parallel", "parallel")),
    )(x3, c3)

    # 'B F C H W -> (B F) C H W' rearrange, contiguous reshape.
    return out3.reshape(BF, C, H, W)


def _reference(x, condition_signal, *, n_frames_sample,
               frame_expansion='last_frame'):
    BF, C, H, W = x.shape
    F = n_frames_sample
    B = BF // F
    Fc = condition_signal.shape[0] // B
    x5 = x.reshape(B, F, C, H, W)
    c5 = condition_signal.reshape(B, Fc, C, H, W)
    if F - Fc > 0 and frame_expansion != 'none':
        if frame_expansion == 'last_frame':
            fill = jnp.repeat(c5[:, -1:], F - Fc, axis=1)
        else:
            fill = jnp.zeros((B, F - Fc, C, H, W), dtype=c5.dtype)
        c5 = jnp.concatenate([c5, fill], axis=1)
    return (x5 + c5).reshape(B * F, C, H, W)


if __name__ == "__main__":
    key = jax.random.PRNGKey(0)
    B, C, H, W = 2, 4, 16, 16

    cases = [
        dict(F=16, Fc=8, expansion='last_frame'),   # main path: head/tail split
        dict(F=16, Fc=8, expansion='zero'),         # zero-fill tail
        dict(F=16, Fc=16, expansion='none'),        # no expansion
        dict(F=16, Fc=4, expansion='last_frame'),   # fallback (Fc not sublane-tileable)
    ]
    for case in cases:
        F, Fc, expansion = case['F'], case['Fc'], case['expansion']
        kx, kc, key = jax.random.split(key, 3)
        x = jax.random.normal(kx, (B * F, C, H, W), dtype=jnp.float32)
        cond = jax.random.normal(kc, (B * Fc, C, H, W), dtype=jnp.float32)

        out = merger_forward(x, cond, n_frames_sample=F,
                             merge_mode='addition',
                             frame_expansion=expansion)
        out = jax.block_until_ready(out)

        ref = _reference(x, cond, n_frames_sample=F,
                         frame_expansion=expansion)
        np.testing.assert_allclose(np.asarray(out), np.asarray(ref),
                                   rtol=1e-6, atol=1e-6)
        assert out.shape == (B * F, C, H, W)

    print("KERNEL_OK")
</pallas_src>

<mosaic_0001>
module attributes {stable_mosaic.version = 11 : i64} {
  func.func @_merge_add_kernel(%arg0: i32, %arg1: i32, %arg2: i32, %arg3: memref<1x8x1024xf32, #tpu.memory_space<vmem>>, %arg4: memref<1x8x1024xf32, #tpu.memory_space<vmem>>, %arg5: memref<1x8x1024xf32, #tpu.memory_space<vmem>>) attributes {dimension_semantics = [#tpu.dimension_semantics<parallel>, #tpu.dimension_semantics<parallel>, #tpu.dimension_semantics<parallel>], iteration_bounds = array<i64: 2, 2, 1>, scalar_prefetch = 0 : i64, scratch_operands = 0 : i64, tpu.core_type = #tpu.core_type<tc>, window_params = [{transform_indices = @transform_0, window_bounds = array<i64: 1, 8, 1024>}, {transform_indices = @transform_1, window_bounds = array<i64: 1, 8, 1024>}, {transform_indices = @transform_2, window_bounds = array<i64: 1, 8, 1024>}]} {
    %c1_i32 = arith.constant 1 : i32
    %0 = arith.cmpi slt, %arg1, %c1_i32 : i32
    %1 = arith.extui %0 : i1 to i32
    %c0_i32 = arith.constant 0 : i32
    %2 = arith.cmpi ne, %1, %c0_i32 : i32
    scf.if %2 {
      %c0 = arith.constant 0 : index
      %c0_2 = arith.constant 0 : index
      %c0_3 = arith.constant 0 : index
      %6 = vector.load %arg3[%c0, %c0_2, %c0_3] : memref<1x8x1024xf32, #tpu.memory_space<vmem>>, vector<1x8x1024xf32>
      %c0_4 = arith.constant 0 : index
      %c0_5 = arith.constant 0 : index
      %c0_6 = arith.constant 0 : index
      %7 = vector.load %arg4[%c0_4, %c0_5, %c0_6] : memref<1x8x1024xf32, #tpu.memory_space<vmem>>, vector<1x8x1024xf32>
      %8 = arith.addf %6, %7 : vector<1x8x1024xf32>
      %c0_7 = arith.constant 0 : index
      %c0_8 = arith.constant 0 : index
      %c0_9 = arith.constant 0 : index
      %9 = vector.load %arg5[%c0_7, %c0_8, %c0_9] : memref<1x8x1024xf32, #tpu.memory_space<vmem>>, vector<1x8x1024xf32>
      tpu.vector_store %arg5[%c0_7, %c0_8, %c0_9], %8 {strides = array<i32>} : memref<1x8x1024xf32, #tpu.memory_space<vmem>>, vector<1x8x1024xf32>,
    } else {
    }
    %c1_i32_0 = arith.constant 1 : i32
    %3 = arith.cmpi sge, %arg1, %c1_i32_0 : i32
    %4 = arith.extui %3 : i1 to i32
    %c0_i32_1 = arith.constant 0 : i32
    %5 = arith.cmpi ne, %4, %c0_i32_1 : i32
    scf.if %5 {
      %c0 = arith.constant 0 : index
      %c0_2 = arith.constant 0 : index
      %c0_3 = arith.constant 0 : index
      %6 = vector.load %arg4[%c0, %c0_2, %c0_3] : memref<1x8x1024xf32, #tpu.memory_space<vmem>>, vector<1x8x1024xf32>
      %7 = vector.extract_strided_slice %6 {offsets = [0, 7, 0], sizes = [1, 1, 1024], strides = [1, 1, 1]} : vector<1x8x1024xf32> to vector<1x1x1024xf32>
      %8 = vector.shape_cast %7 : vector<1x1x1024xf32> to vector<1x1024xf32>
      %c0_4 = arith.constant 0 : index
      %c0_5 = arith.constant 0 : index
      %c0_6 = arith.constant 0 : index
      %9 = vector.load %arg3[%c0_4, %c0_5, %c0_6] : memref<1x8x1024xf32, #tpu.memory_space<vmem>>, vector<1x8x1024xf32>
      %10 = vector.shape_cast %8 : vector<1x1024xf32> to vector<1x1x1024xf32>
      %11 = vector.broadcast %10 : vector<1x1x1024xf32> to vector<1x8x1024xf32>
      %12 = arith.addf %9, %11 : vector<1x8x1024xf32>
      %c0_7 = arith.constant 0 : index
      %c0_8 = arith.constant 0 : index
      %c0_9 = arith.constant 0 : index
      %13 = vector.load %arg5[%c0_7, %c0_8, %c0_9] : memref<1x8x1024xf32, #tpu.memory_space<vmem>>, vector<1x8x1024xf32>
      tpu.vector_store %arg5[%c0_7, %c0_8, %c0_9], %12 {strides = array<i32>} : memref<1x8x1024xf32, #tpu.memory_space<vmem>>, vector<1x8x1024xf32>,
    } else {
    }
    return
  }
  func.func @transform_0(%arg0: i32, %arg1: i32, %arg2: i32) -> (i32, i32, i32) {
    %c0_i32 = arith.constant 0 : i32
    return %arg0, %arg1, %arg2 : i32, i32, i32
  }
  func.func @transform_1(%arg0: i32, %arg1: i32, %arg2: i32) -> (i32, i32, i32) {
    %c0_i32 = arith.constant 0 : i32
    %0 = arith.minsi %arg1, %c0_i32 : i32
    %c0_i32_0 = arith.constant 0 : i32
    return %arg0, %0, %arg2 : i32, i32, i32
  }
  func.func @transform_2(%arg0: i32, %arg1: i32, %arg2: i32) -> (i32, i32, i32) {
    %c0_i32 = arith.constant 0 : i32
    return %arg0, %arg1, %arg2 : i32, i32, i32
  }
}

</mosaic_0001>

<llo_original>
// kernel: tpu_custom_call.1
$region0: #{tpu_custom_call.1}
  #allocation0 [shape = 'u32[]', space=smem, size = 0x4, offset = 0x4, fixed_abs, tag = 'smem constant byte address 0x4 - core index']
  #allocation1 [shape = 'u32[144,128]{1,0:T(1,128)}', space=vmem, size = 0x12000, scoped, tag = 'internal scratch']
  %s0 = inlined_call_operand.hbm [shape: f32[2,16,1024], index: 0, kind: input, shape index: {}]
  %s1 = inlined_call_operand.hbm [shape: f32[2,8,1024], index: 1, kind: input, shape index: {}]
  %s2 = inlined_call_operand.hbm [shape: f32[2,16,1024], index: 2, kind: output, shape index: {}]
  %s3 = sld [smem:[#allocation0]]
  $region57: #{tpu_custom_call.1} parent=0
    _
  %s5 = ssub.s32 1, %s3
  %s6 = scalar_select 0, %s5, %s3
  $region1: #{tpu_custom_call.1} parent=0
    #allocation2 [shape = 'u8[65536]{0}', space=vmem, size = 0x10000, scoped, tag = 'input window, operand 0']
    #allocation3 [shape = 's32[2]{0}', space=sflag, size = 0x8, scoped, tag = 'scoped memory for tpu_custom_call.1']
    #allocation4 [shape = 's32[2]{0}', space=sflag, size = 0x8, scoped, tag = 'scoped memory for tpu_custom_call.1']
    #allocation5 [shape = 'u8[65536]{0}', space=vmem, size = 0x10000, scoped, tag = 'input window, operand 1']
    #allocation6 [shape = 's32[2]{0}', space=sflag, size = 0x8, scoped, tag = 'scoped memory for tpu_custom_call.1']
    #allocation7 [shape = 'u8[65536]{0}', space=vmem, size = 0x10000, scoped, tag = 'output window, operand 0']
    %7 = vsyncpa [#allocation3], 0
    %s8 = scalar_lea.sflag [#allocation3], 1
    %9 = vsyncpa %s8, 0
    %10 = vsyncpa [#allocation6], 0
    %s11 = scalar_lea.sflag [#allocation6], 1
    %12 = vsyncpa %s11, 0
    %13 = vsyncpa [#allocation4], 0
    %s14 = scalar_lea.sflag [#allocation4], 1
    %15 = vsyncpa %s14, 0
    loop: start=0, step=1, limit=6
    $region2: #{tpu_custom_call.1} parent=1 // loop_pre_header
      _
    $region3: #{tpu_custom_call.1} parent=1 // loop_header
      %s17 = sphi 0, %s21
      %p18 = scmp.ge.s32.totalorder %s17, 6
      %s24 = sphi 0, %s43
      %s25 = sphi 0, %s39
      %s26 = sphi 0, %s35
      %s27 = sphi 0, %s24
      %s28 = sphi 0, %s25
      %s29 = sphi 0, %s26
      %s30 = sphi 0, %s27
      %s31 = sphi 0, %s28
      %s32 = sphi 0, %s29
      %s50 = sphi 0, %s52
      %s53 = sphi 0, %s50
      %s54 = sphi 0, %s53
      %s70 = sphi 0, %s54
      %s84 = sphi 0, %s86
      %s87 = sphi 0, %s84
      %s88 = sphi 0, %s87
      %s104 = sphi 0, %s88
      %s114 = sphi 0, %s116
      %s117 = sphi 0, %s114
      %s118 = sphi 0, %s117
      %s134 = sphi 0, %s118
    $region4: #{tpu_custom_call.1} parent=1 // loop_header_branch
      %20 = sbr.rel (%p18) target = $region8
    $region5: #{tpu_custom_call.1} parent=1 // loop_body
      %s22 = ssub.s32 %s17, 1
      %s23 = ssub.s32 %s17, 2
      %s33 = sadd.s32 1, %s26
      %p34 = scmp.ge.s32.totalorder %s33, 1
      %s35 = scalar_select %p34, 0, %s33
      %s36 = sadd.s32 1, %s25
      %s37 = scalar_select %p34, %s36, %s25
      %p38 = scmp.ge.s32.totalorder %s37, 2
      %s39 = scalar_select %p38, 0, %s37
      %s40 = sadd.s32 1, %s24
      %s41 = scalar_select %p38, %s40, %s24
      %p42 = scmp.ge.s32.totalorder %s41, 2
      %s43 = scalar_select %p42, 0, %s41
      %s44 = ssub.s32 %s24, %s43
      %s45 = ssub.s32 %s25, %s39
      %s46 = sor.u32 %s44, %s45
      %s47 = ssub.s32 %s26, %s35
      %s48 = sor.u32 %s46, %s47
      %p49 = scmp.eq.s32.totalorder %s48, 0
      %s51 = sadd.s32 %s50, 1
      %s52 = scalar_select %p49, %s50, %s51
      %p55 = pneg %p49
      %p56 = scmp.eq.s32.totalorder %s17, 3
      %p57 = por %p55, %p56
      %p58 = scmp.ne.s32.totalorder %s50, %s53
      %p59 = scmp.eq.s32.totalorder %s17, 0
      %p60 = por %p58, %p59
      %p61 = scmp.ne.s32.totalorder %s50, %s53
      %p62 = scmp.eq.s32.totalorder %s22, 3
      %p63 = por %p61, %p62
      %p64 = scmp.ne.s32.totalorder %s53, %s54
      %p65 = scmp.eq.s32.totalorder %s22, 0
      %p66 = por %p64, %p65
      %p67 = scmp.ne.s32.totalorder %s53, %s54
      %p68 = scmp.eq.s32.totalorder %s23, 3
      %p69 = por %p67, %p68
      %p71 = scmp.ne.s32.totalorder %s54, %s70
      %p72 = scmp.eq.s32.totalorder %s23, 0
      %p73 = por %p71, %p72
      %p74 = scmp.lt.s32.totalorder %s25, 0
      %s75 = scalar_select %p74, %s25, 0
      %p76 = scmp.lt.s32.totalorder %s39, 0
      %s77 = scalar_select %p76, %s39, 0
      %s78 = ssub.s32 %s24, %s43
      %s79 = ssub.s32 %s75, %s77
      %s80 = sor.u32 %s78, %s79
      %s81 = ssub.s32 %s26, %s35
      %s82 = sor.u32 %s80, %s81
      %p83 = scmp.eq.s32.totalorder %s82, 0
      %s85 = sadd.s32 %s84, 1
      %s86 = scalar_select %p83, %s84, %s85
      %p89 = pneg %p83
      %p90 = scmp.eq.s32.totalorder %s17, 3
      %p91 = por %p89, %p90
      %p92 = scmp.ne.s32.totalorder %s84, %s87
      %p93 = scmp.eq.s32.totalorder %s17, 0
      %p94 = por %p92, %p93
      %p95 = scmp.ne.s32.totalorder %s84, %s87
      %p96 = scmp.eq.s32.totalorder %s22, 3
      %p97 = por %p95, %p96
      %p98 = scmp.ne.s32.totalorder %s87, %s88
      %p99 = scmp.eq.s32.totalorder %s22, 0
      %p100 = por %p98, %p99
      %p101 = scmp.ne.s32.totalorder %s87, %s88
      %p102 = scmp.eq.s32.totalorder %s23, 3
      %p103 = por %p101, %p102
      %p105 = scmp.ne.s32.totalorder %s88, %s104
      %p106 = scmp.eq.s32.totalorder %s23, 0
      %p107 = por %p105, %p106
      %s108 = ssub.s32 %s24, %s43
      %s109 = ssub.s32 %s25, %s39
      %s110 = sor.u32 %s108, %s109
      %s111 = ssub.s32 %s26, %s35
      %s112 = sor.u32 %s110, %s111
      %p113 = scmp.eq.s32.totalorder %s112, 0
      %s115 = sadd.s32 %s114, 1
      %s116 = scalar_select %p113, %s114, %s115
      %p119 = pneg %p113
      %p120 = scmp.eq.s32.totalorder %s17, 3
      %p121 = por %p119, %p120
      %p122 = scmp.ne.s32.totalorder %s114, %s117
      %p123 = scmp.eq.s32.totalorder %s17, 0
      %p124 = por %p122, %p123
      %p125 = scmp.ne.s32.totalorder %s114, %s117
      %p126 = scmp.eq.s32.totalorder %s22, 3
      %p127 = por %p125, %p126
      %p128 = scmp.ne.s32.totalorder %s117, %s118
      %p129 = scmp.eq.s32.totalorder %s22, 0
      %p130 = por %p128, %p129
      %p131 = scmp.ne.s32.totalorder %s117, %s118
      %p132 = scmp.eq.s32.totalorder %s23, 3
      %p133 = por %p131, %p132
      %p135 = scmp.ne.s32.totalorder %s118, %s134
      %p136 = scmp.eq.s32.totalorder %s23, 0
      %p137 = por %p135, %p136
      %p138 = scmp.le.s32.totalorder 1, %s17
      %p139 = scmp.lt.s32.totalorder %s17, 5
      %p140 = pnand %p138, %p139
      %p141 = pneg %p140
      // Predicated region
      $region9: #{tpu_custom_call.1} parent=5 // pred_check
        _
      $region10: #{tpu_custom_call.1} parent=5 // pred_check_branch
        %143 = sbr.rel (%p140) target = $region12
      $region11: #{tpu_custom_call.1} parent=5 // pred_region
        %s144 = ssub.s32 %s17, 1
      $region12: #{tpu_custom_call.1} parent=5 // pred_fallthru
        _
      %p145 = scmp.lt.s32.totalorder %s17, 4
      // Predicated region
      $region13: #{tpu_custom_call.1} parent=5 // pred_check
        %p146 = pneg %p145
      $region14: #{tpu_custom_call.1} parent=5 // pred_check_branch
        %148 = sbr.rel (%p146) target = $region16
      $region15: #{tpu_custom_call.1} parent=5 // pred_region
        // Predicated region
        $region17: #{tpu_custom_call.1} parent=15 // pred_check
          %p149 = pneg %p60
        $region18: #{tpu_custom_call.1} parent=15 // pred_check_branch
          %151 = sbr.rel (%p149) target = $region20
        $region19: #{tpu_custom_call.1} parent=15 // pred_region
          %s152 = sand.u32 %s50, 1
          %s153 = scalar_lea.sflag [#allocation3], %s152
          %s154 = sand.u32 %s50, 1
          %s155 = smul.addr %s154, 64
          %s156 = scalar_lea.vmem [#allocation2], %s155
          %s157 = smul.u32 8, %s26
          %s159 = ssub.s32 1024, 1024
          %160 = vsyncadd %s153, %s159
          %s161 = smul.addr %s25, 8
          %s162 = sadd.s32 %s157, %s161
          %s163 = smul.addr %s24, 16
          %s164 = sadd.s32 %s162, %s163
          %s165 = smul.addr %s164, 128
          %s166 = scalar_lea.hbm %s0, %s165
          %s168 = sshll.u32 %s156, 4
          %s169 = int_to_ptr.vmem [resolvable:$true] %s168
          %171 = dma.hbm_to_vmem [thread:$0]  %s166, 1024, %s169, %s153
        $region20: #{tpu_custom_call.1} parent=15 // pred_fallthru
          _
        // Predicated region
        $region21: #{tpu_custom_call.1} parent=15 // pred_check
          %p172 = pneg %p94
        $region22: #{tpu_custom_call.1} parent=15 // pred_check_branch
          %174 = sbr.rel (%p172) target = $region24
        $region23: #{tpu_custom_call.1} parent=15 // pred_region
          %s175 = sand.u32 %s84, 1
          %s176 = scalar_lea.sflag [#allocation6], %s175
          %s177 = sand.u32 %s84, 1
          %s178 = smul.addr %s177, 64
          %s179 = scalar_lea.vmem [#allocation5], %s178
          %p180 = scmp.lt.s32.totalorder %s25, 0
          %s181 = scalar_select %p180, %s25, 0
          %s182 = smul.u32 8, %s26
          %s184 = ssub.s32 1024, 1024
          %185 = vsyncadd %s176, %s184
          %s186 = smul.addr %s181, 8
          %s187 = sadd.s32 %s182, %s186
          %s188 = smul.addr %s24, 8
          %s189 = sadd.s32 %s187, %s188
          %s190 = smul.addr %s189, 128
          %s191 = scalar_lea.hbm %s1, %s190
          %s193 = sshll.u32 %s179, 4
          %s194 = int_to_ptr.vmem [resolvable:$true] %s193
          %196 = dma.hbm_to_vmem [thread:$0]  %s191, 1024, %s194, %s176
        $region24: #{tpu_custom_call.1} parent=15 // pred_fallthru
          _
      $region16: #{tpu_custom_call.1} parent=5 // pred_fallthru
        _
      %p197 = scmp.le.s32.totalorder 1, %s17
      %p198 = scmp.lt.s32.totalorder %s17, 5
      %p199 = pnand %p197, %p198
      %p200 = pneg %p199
      // Predicated region
      $region25: #{tpu_custom_call.1} parent=5 // pred_check
        _
      $region26: #{tpu_custom_call.1} parent=5 // pred_check_branch
        %202 = sbr.rel (%p199) target = $region28
      $region27: #{tpu_custom_call.1} parent=5 // pred_region
        %s203 = ssub.s32 %s17, 1
        %s204 = sand.u32 %s53, 1
        %s205 = scalar_lea.sflag [#allocation3], %s204
        %s206 = sand.u32 %s53, 1
        %s207 = smul.addr %s206, 64
        %s208 = scalar_lea.vmem [#allocation2], %s207
        // Predicated region
        $region29: #{tpu_custom_call.1} parent=27 // pred_check
          %p209 = pneg %p66
        $region30: #{tpu_custom_call.1} parent=27 // pred_check_branch
          %211 = sbr.rel (%p209) target = $region32
        $region31: #{tpu_custom_call.1} parent=27 // pred_region
          %212 = dma.done %s205, 1024
        $region32: #{tpu_custom_call.1} parent=27 // pred_fallthru
          _
        %s213 = sand.u32 %s87, 1
        %s214 = scalar_lea.sflag [#allocation6], %s213
        %s215 = sand.u32 %s87, 1
        %s216 = smul.addr %s215, 64
        %s217 = scalar_lea.vmem [#allocation5], %s216
        // Predicated region
        $region33: #{tpu_custom_call.1} parent=27 // pred_check
          %p218 = pneg %p100
        $region34: #{tpu_custom_call.1} parent=27 // pred_check_branch
          %220 = sbr.rel (%p218) target = $region36
        $region35: #{tpu_custom_call.1} parent=27 // pred_region
          %221 = dma.done %s214, 1024
        $region36: #{tpu_custom_call.1} parent=27 // pred_fallthru
          _
        %s222 = sand.u32 %s53, 1
        %s223 = scalar_lea.sflag [#allocation3], %s222
        %s224 = sand.u32 %s53, 1
        %s225 = smul.addr %s224, 64
        %s226 = scalar_lea.vmem [#allocation2], %s225
        %p227 = pneg %p66
        %p228 = pneg %p63
        %s229 = sand.u32 %s87, 1
        %s230 = scalar_lea.sflag [#allocation6], %s229
        %s231 = sand.u32 %s87, 1
        %s232 = smul.addr %s231, 64
        %s233 = scalar_lea.vmem [#allocation5], %s232
        %p234 = pneg %p100
        %p235 = pneg %p97
        %p236 = pneg %p130
        %p237 = pneg %p127
        %s238 = sand.u32 %s117, 1
        %s239 = scalar_lea.sflag [#allocation4], %s238
        %s240 = sand.u32 %s117, 1
        %s241 = smul.addr %s240, 64
        %s242 = scalar_lea.vmem [#allocation7], %s241
        %s243 = smul.u32 8, %s29
        %p244 = scmp.lt.s32.totalorder %s28, 0
        %s245 = scalar_select %p244, %s28, 0
        %s246 = smul.u32 8, %s29
        %s247 = smul.u32 8, %s29
        %p248 = scmp.lt.s32.totalorder %s28, 1
        // Predicated region
        $region37: #{tpu_custom_call.1} parent=27 // pred_check
          %p249 = pneg %p248
        $region38: #{tpu_custom_call.1} parent=27 // pred_check_branch
          %251 = sbr.rel (%p249) target = $region40
        $region39: #{tpu_custom_call.1} parent=27 // pred_region
          %v252 = vld [vmem:[%s208] sm:$0xff]
          %v253 = vld [vmem:[%s208 + $0x8] sm:$0xff]
          %v254 = vld [vmem:[%s208 + $0x10] sm:$0xff]
          %v255 = vld [vmem:[%s208 + $0x18] sm:$0xff]
          %v256 = vld [vmem:[%s208 + $0x20] sm:$0xff]
          %v257 = vld [vmem:[%s208 + $0x28] sm:$0xff]
          %v258 = vld [vmem:[%s208 + $0x30] sm:$0xff]
          %v259 = vld [vmem:[%s208 + $0x38] sm:$0xff]
          %v260 = vld [vmem:[%s217] sm:$0xff]
          %v261 = vld [vmem:[%s217 + $0x8] sm:$0xff]
          %v262 = vld [vmem:[%s217 + $0x10] sm:$0xff]
          %v263 = vld [vmem:[%s217 + $0x18] sm:$0xff]
          %v264 = vld [vmem:[%s217 + $0x20] sm:$0xff]
          %v265 = vld [vmem:[%s217 + $0x28] sm:$0xff]
          %v266 = vld [vmem:[%s217 + $0x30] sm:$0xff]
          %v267 = vld [vmem:[%s217 + $0x38] sm:$0xff]
          %v268 = vadd.f32 %v252, %v260
          %v269 = vadd.f32 %v253, %v261
          %v270 = vadd.f32 %v254, %v262
          %v271 = vadd.f32 %v255, %v263
          %v272 = vadd.f32 %v256, %v264
          %v273 = vadd.f32 %v257, %v265
          %v274 = vadd.f32 %v258, %v266
          %v275 = vadd.f32 %v259, %v267
          %276 = vst [vmem:[%s242] sm:$0xff] %v268
          %277 = vst [vmem:[%s242 + $0x8] sm:$0xff] %v269
          %278 = vst [vmem:[%s242 + $0x10] sm:$0xff] %v270
          %279 = vst [vmem:[%s242 + $0x18] sm:$0xff] %v271
          %280 = vst [vmem:[%s242 + $0x20] sm:$0xff] %v272
          %281 = vst [vmem:[%s242 + $0x28] sm:$0xff] %v273
          %282 = vst [vmem:[%s242 + $0x30] sm:$0xff] %v274
          %283 = vst [vmem:[%s242 + $0x38] sm:$0xff] %v275
        $region40: #{tpu_custom_call.1} parent=27 // pred_fallthru
          _
        %p284 = scmp.ge.s32.totalorder %s28, 1
        // Predicated region
        $region41: #{tpu_custom_call.1} parent=27 // pred_check
          %p285 = pneg %p284
        $region42: #{tpu_custom_call.1} parent=27 // pred_check_branch
          %287 = sbr.rel (%p285) target = $region44
        $region43: #{tpu_custom_call.1} parent=27 // pred_region
          %v288 = vld [vmem:[%s217] sm:$0xff]
          %v289 = vld [vmem:[%s217 + $0x8] sm:$0xff]
          %v290 = vld [vmem:[%s217 + $0x10] sm:$0xff]
          %v291 = vld [vmem:[%s217 + $0x18] sm:$0xff]
          %v292 = vld [vmem:[%s217 + $0x20] sm:$0xff]
          %v293 = vld [vmem:[%s217 + $0x28] sm:$0xff]
          %v294 = vld [vmem:[%s217 + $0x30] sm:$0xff]
          %v295 = vld [vmem:[%s217 + $0x38] sm:$0xff]
          %v296 = vld [vmem:[%s208] sm:$0xff]
          %v297 = vld [vmem:[%s208 + $0x8] sm:$0xff]
          %v298 = vld [vmem:[%s208 + $0x10] sm:$0xff]
          %v299 = vld [vmem:[%s208 + $0x18] sm:$0xff]
          %v300 = vld [vmem:[%s208 + $0x20] sm:$0xff]
          %v301 = vld [vmem:[%s208 + $0x28] sm:$0xff]
          %v302 = vld [vmem:[%s208 + $0x30] sm:$0xff]
          %v303 = vld [vmem:[%s208 + $0x38] sm:$0xff]
          %v304 = vlaneseq
          %v305 = vshrl.u32 %v304, 7
          %v306 = vsub.s32 7, %v305
          %v307 = vrot.slane %v288, %v306
          %v308 = vlaneseq
          %v309 = vshrl.u32 %v308, 7
          %v310 = vsub.s32 7, %v309
          %v311 = vrot.slane %v289, %v310
          %v312 = vlaneseq
          %v313 = vshrl.u32 %v312, 7
          %v314 = vsub.s32 7, %v313
          %v315 = vrot.slane %v290, %v314
          %v316 = vlaneseq
          %v317 = vshrl.u32 %v316, 7
          %v318 = vsub.s32 7, %v317
          %v319 = vrot.slane %v291, %v318
          %v320 = vlaneseq
          %v321 = vshrl.u32 %v320, 7
          %v322 = vsub.s32 7, %v321
          %v323 = vrot.slane %v292, %v322
          %v324 = vlaneseq
          %v325 = vshrl.u32 %v324, 7
          %v326 = vsub.s32 7, %v325
          %v327 = vrot.slane %v293, %v326
          %v328 = vlaneseq
          %v329 = vshrl.u32 %v328, 7
          %v330 = vsub.s32 7, %v329
          %v331 = vrot.slane %v294, %v330
          %v332 = vlaneseq
          %v333 = vshrl.u32 %v332, 7
          %v334 = vsub.s32 7, %v333
          %v335 = vrot.slane %v295, %v334
          %v336 = vadd.f32 %v296, %v307
          %v337 = vadd.f32 %v297, %v311
          %v338 = vadd.f32 %v298, %v315
          %v339 = vadd.f32 %v299, %v319
          %v340 = vadd.f32 %v300, %v323
          %v341 = vadd.f32 %v301, %v327
          %v342 = vadd.f32 %v302, %v331
          %v343 = vadd.f32 %v303, %v335
          %344 = vst [vmem:[%s242] sm:$0xff] %v336
          %345 = vst [vmem:[%s242 + $0x8] sm:$0xff] %v337
          %346 = vst [vmem:[%s242 + $0x10] sm:$0xff] %v338
          %347 = vst [vmem:[%s242 + $0x18] sm:$0xff] %v339
          %348 = vst [vmem:[%s242 + $0x20] sm:$0xff] %v340
          %349 = vst [vmem:[%s242 + $0x28] sm:$0xff] %v341
          %350 = vst [vmem:[%s242 + $0x30] sm:$0xff] %v342
          %351 = vst [vmem:[%s242 + $0x38] sm:$0xff] %v343
        $region44: #{tpu_custom_call.1} parent=27 // pred_fallthru
          _
        %s352 = sand.u32 %s117, 1
        %s353 = scalar_lea.sflag [#allocation4], %s352
        %s354 = sand.u32 %s117, 1
        %s355 = smul.addr %s354, 64
        %s356 = scalar_lea.vmem [#allocation7], %s355
        // Predicated region
        $region45: #{tpu_custom_call.1} parent=27 // pred_check
          %p357 = pneg %p127
        $region46: #{tpu_custom_call.1} parent=27 // pred_check_branch
          %359 = sbr.rel (%p357) target = $region48
        $region47: #{tpu_custom_call.1} parent=27 // pred_region
          %s360 = smul.u32 8, %s29
          %s362 = ssub.s32 1024, 1024
          %363 = vsyncadd %s353, %s362
          %s364 = smul.addr %s28, 8
          %s365 = sadd.s32 %s360, %s364
          %s366 = smul.addr %s27, 16
          %s367 = sadd.s32 %s365, %s366
          %s368 = smul.addr %s367, 128
          %s369 = scalar_lea.hbm %s2, %s368
          %s371 = sshll.u32 %s356, 4
          %s372 = int_to_ptr.vmem [resolvable:$true] %s371
          %374 = dma.vmem_to_hbm [thread:$0]  %s372, 1024, %s369, %s353
        $region48: #{tpu_custom_call.1} parent=27 // pred_fallthru
          _
      $region28: #{tpu_custom_call.1} parent=5 // pred_fallthru
        _
      %p375 = scmp.le.s32.totalorder 2, %s17
      // Predicated region
      $region49: #{tpu_custom_call.1} parent=5 // pred_check
        %p376 = pneg %p375
      $region50: #{tpu_custom_call.1} parent=5 // pred_check_branch
        %378 = sbr.rel (%p376) target = $region52
      $region51: #{tpu_custom_call.1} parent=5 // pred_region
        %s379 = ssub.s32 %s17, 2
        // Predicated region
        $region53: #{tpu_custom_call.1} parent=51 // pred_check
          %p380 = pneg %p133
        $region54: #{tpu_custom_call.1} parent=51 // pred_check_branch
          %382 = sbr.rel (%p380) target = $region56
        $region55: #{tpu_custom_call.1} parent=51 // pred_region
          %s383 = sand.u32 %s118, 1
          %s384 = scalar_lea.sflag [#allocation4], %s383
          %s385 = sand.u32 %s118, 1
          %s386 = smul.addr %s385, 64
          %s387 = scalar_lea.vmem [#allocation7], %s386
          %388 = dma.done %s384, 1024
        $region56: #{tpu_custom_call.1} parent=51 // pred_fallthru
          _
      $region52: #{tpu_custom_call.1} parent=5 // pred_fallthru
        _
    $region6: #{tpu_custom_call.1} parent=1 // loop_footer
      %s21 = sadd.s32 1, %s17
    $region7: #{tpu_custom_call.1} parent=1 // loop_footer_branch
      %16 = sbr.rel target = $region3
    $region8: #{tpu_custom_call.1} parent=1 // loop_exit
      _
    %389 = vsyncpa [#allocation3], 1
    %s390 = scalar_lea.sflag [#allocation3], 1
    %391 = vsyncpa %s390, 1
    %392 = vsyncpa [#allocation6], 1
    %s393 = scalar_lea.sflag [#allocation6], 1
    %394 = vsyncpa %s393, 1
    %395 = vsyncpa [#allocation4], 1
    %s396 = scalar_lea.sflag [#allocation4], 1
    %397 = vsyncpa %s396, 1

</llo_original>
